<compile_context>
chip_gen: v7x
topology: tpu7x:2x2x1
jax: 0.10.0
libtpu: 0.0.40
codegen_flags: <defaults>
</compile_context>

<pallas_src>
import jax
import jax.numpy as jnp
import numpy as np
from jax.experimental import pallas as pl
from jax.experimental.pallas import tpu as pltpu

LANE = 128


# ----------------------------------------------------------------------------
# Kernel
# ----------------------------------------------------------------------------
def _softplus(x):
    return jnp.logaddexp(x, 0.0)


def _make_kernel(num_layers, slab):
    def kernel(x_ref, w0_ref, wrest_ref, rows_ref, out_ref):
        # Layer 0: (tile_n, d0) @ (d0, HP)
        h = jnp.dot(x_ref[...], w0_ref[...], preferred_element_type=jnp.float32)
        h = h + rows_ref[0:1, :]
        h = h * jax.nn.sigmoid(h)                                  # SiLU

        # Layers 1 .. L-1: (tile_n, HP) @ (HP, HP), SiLU on all but last.
        for l in range(1, num_layers):
            h = jnp.dot(h, wrest_ref[l - 1],
                        preferred_element_type=jnp.float32)
            h = h + rows_ref[l:l + 1, :]
            if l < num_layers - 1:
                h = h * jax.nn.sigmoid(h)

        # Epilogue: soft_clamp ONLY on the logvar slab [slab, 2*slab).
        lv = h[:, slab:2 * slab]
        max_lv = rows_ref[num_layers:num_layers + 1, slab:2 * slab]
        min_lv = rows_ref[num_layers + 1:num_layers + 2, slab:2 * slab]
        lv = max_lv - _softplus(max_lv - lv)
        lv = min_lv + _softplus(lv - min_lv)

        out_ref[:, :slab] = h[:, :slab]        # mu slab, untouched
        out_ref[:, slab:2 * slab] = lv         # clamped logvar slab

    return kernel


# ----------------------------------------------------------------------------
# Parameter packing (done once, outside the kernel)
# ----------------------------------------------------------------------------
def _round_up(n, m):
    return ((n + m - 1) // m) * m


def _pad2d(a, rows, cols):
    return jnp.pad(a, ((0, rows - a.shape[0]), (0, cols - a.shape[1])))


def _block_diag(blocks):
    e = len(blocks)
    r, c = blocks[0].shape
    out = jnp.zeros((e * r, e * c), blocks[0].dtype)
    for i, blk in enumerate(blocks):
        out = out.at[i * r:(i + 1) * r, i * c:(i + 1) * c].set(blk)
    return out


def pack_ensemble_params(weights, biases, min_logvar, max_logvar, lane=LANE):
    """Fuse per-ensemble weights into concat / block-diagonal lane-padded mats,
    with the last layer's columns split into a mu slab and a logvar slab."""
    E = weights[0].shape[0]
    L = len(weights)
    assert L >= 2, "EnsembleMLP always has at least one hidden layer"
    dims = [weights[0].shape[1]] + [w.shape[2] for w in weights]   # [d0,...,dL]
    out_dim = dims[-1]
    out_half = out_dim // 2

    slab = _round_up(E * out_half, lane)          # width of the mu (and logvar) slab
    out_w = 2 * slab                              # kernel output lane width
    hidden_pad = [_round_up(E * d, lane) for d in dims[1:-1]]
    hp = max(hidden_pad + [out_w])                # one common padded width

    # ---- layer 0: (E, d0, d1) -> (d0, E*d1), member e in cols [e*d1,(e+1)*d1)
    d0, d1 = dims[0], dims[1]
    w0 = jnp.transpose(weights[0], (1, 0, 2)).reshape(d0, E * d1)
    w_first = _pad2d(w0.astype(jnp.float32), d0, hp)

    # ---- middle layers: block-diagonal, zero-padded to (hp, hp)
    rest = []
    for l in range(1, L - 1):
        w = _block_diag([weights[l][e].astype(jnp.float32) for e in range(E)])
        rest.append(_pad2d(w, hp, hp))

    # ---- last layer: block diag with columns re-ordered so all mu columns come
    # first (member-major, lanes [0, E*out_half)) and all logvar columns sit in
    # the next 128-aligned slab (lanes [slab, slab + E*out_half)).
    d_prev = dims[L - 1]
    wl = jnp.zeros((hp, hp), jnp.float32)
    bl = jnp.zeros((1, hp), jnp.float32)
    for e in range(E):
        we = weights[L - 1][e].astype(jnp.float32)       # (d_prev, out_dim)
        be = biases[L - 1][e, 0].astype(jnp.float32)     # (out_dim,)
        r0, r1 = e * d_prev, (e + 1) * d_prev
        m0, m1 = e * out_half, (e + 1) * out_half
        wl = wl.at[r0:r1, m0:m1].set(we[:, :out_half])
        wl = wl.at[r0:r1, slab + m0:slab + m1].set(we[:, out_half:])
        bl = bl.at[0, m0:m1].set(be[:out_half])
        bl = bl.at[0, slab + m0:slab + m1].set(be[out_half:])
    rest.append(wl)
    w_rest = jnp.stack(rest, axis=0)                     # (L-1, hp, hp)

    # ---- row-vector bundle: biases 0..L-2, last bias, max row, min row
    rows = []
    for l in range(L - 1):
        b = biases[l].reshape(1, E * dims[l + 1]).astype(jnp.float32)
        rows.append(_pad2d(b, 1, hp))
    rows.append(bl)
    max_row = jnp.zeros((1, hp), jnp.float32)
    min_row = jnp.zeros((1, hp), jnp.float32)
    for e in range(E):
        m0, m1 = slab + e * out_half, slab + (e + 1) * out_half
        max_row = max_row.at[0, m0:m1].set(max_logvar.astype(jnp.float32))
        min_row = min_row.at[0, m0:m1].set(min_logvar.astype(jnp.float32))
    rows.append(max_row)
    rows.append(min_row)
    rows_mat = jnp.concatenate(rows, axis=0)             # (L+2, hp)
    rows_mat = _pad2d(rows_mat, _round_up(L + 2, 8), hp)

    return dict(
        w_first=w_first, w_rest=w_rest, rows=rows_mat,
        E=E, num_layers=L, out_half=out_half,
        hp=hp, slab=slab, out_w=out_w, d0=d0,
    )


# ----------------------------------------------------------------------------
# Forward
# ----------------------------------------------------------------------------
def ensemble_mlp_forward(x, packed, tile_n=512):
    """x: (N, D_in) float32 (torch 2-D input path, broadcast over the ensemble).
    Returns (mu, logvar), each of shape (E, N, out_half)."""
    N, d0 = x.shape
    assert d0 == packed["d0"]
    L = packed["num_layers"]
    hp, slab, out_w = packed["hp"], packed["slab"], packed["out_w"]
    E, out_half = packed["E"], packed["out_half"]

    # Batch tiling: small batches collapse to a single full-array block,
    # larger batches run a pipelined grid over tile_n-row tiles.
    # (On v5e prefer tile_n in 512..1024; 512..2048 elsewhere.)
    n_pad = _round_up(N, 8)
    if n_pad <= tile_n:
        tile_n = n_pad
    else:
        n_pad = _round_up(N, tile_n)
    xp = jnp.pad(x.astype(jnp.float32), ((0, n_pad - N), (0, 0)))

    grid = (n_pad // tile_n,)
    R = packed["rows"].shape[0]

    params_bytes = 4 * (packed["w_first"].size + packed["w_rest"].size
                        + packed["rows"].size)
    block_bytes = 4 * tile_n * (d0 + out_w)
    vmem_limit = int(min(2 * (params_bytes + block_bytes) + (16 << 20), 64 << 20))

    flops = int(2 * n_pad * (d0 * hp + (L - 1) * hp * hp))
    transcendentals = int(n_pad * (hp * (L - 1) + 2 * slab))
    bytes_accessed = int(4 * n_pad * (d0 + out_w) + params_bytes)

    out = pl.pallas_call(
        _make_kernel(L, slab),
        out_shape=jax.ShapeDtypeStruct((n_pad, out_w), jnp.float32),
        grid=grid,
        in_specs=[
            pl.BlockSpec((tile_n, d0), lambda i: (i, 0)),        # x: tiled over N
            pl.BlockSpec((d0, hp), lambda i: (0, 0)),            # w_first: resident
            pl.BlockSpec((L - 1, hp, hp), lambda i: (0, 0, 0)),  # w_rest: resident
            pl.BlockSpec((R, hp), lambda i: (0, 0)),             # biases/min/max: resident
        ],
        out_specs=pl.BlockSpec((tile_n, out_w), lambda i: (i, 0)),
        compiler_params=pltpu.CompilerParams(
            dimension_semantics=("parallel",),
            vmem_limit_bytes=vmem_limit),
        cost_estimate=pl.CostEstimate(
            flops=flops, transcendentals=transcendentals,
            bytes_accessed=bytes_accessed),
    )(xp, packed["w_first"], packed["w_rest"], packed["rows"])

    out = out[:N]
    mu = out[:, :E * out_half].reshape(N, E, out_half).transpose(1, 0, 2)
    logvar = out[:, slab:slab + E * out_half].reshape(N, E, out_half).transpose(1, 0, 2)
    return mu, logvar


# ----------------------------------------------------------------------------
# Init + pure-JAX reference (mirrors the torch module)
# ----------------------------------------------------------------------------
def init_params(key, obs_dim, act_dim, hidden, ensemble_size, with_reward=True):
    sizes = [obs_dim + act_dim] + list(hidden) + [2 * (obs_dim + int(with_reward))]
    weights, biases = [], []
    for j in range(len(sizes) - 1):
        key, sub = jax.random.split(key)
        std = 1.0 / (2.0 * (sizes[j] ** 0.5))
        w = jax.random.truncated_normal(
            sub, -2.0, 2.0, (ensemble_size, sizes[j], sizes[j + 1]),
            dtype=jnp.float32) * std
        b = jnp.zeros((ensemble_size, 1, sizes[j + 1]), jnp.float32)
        weights.append(w)
        biases.append(b)
    out_half = obs_dim + int(with_reward)
    max_logvar = jnp.ones((out_half,), jnp.float32) * 0.5
    min_logvar = jnp.ones((out_half,), jnp.float32) * -10.0
    return weights, biases, min_logvar, max_logvar


def reference_forward(x, weights, biases, min_logvar, max_logvar):
    h = jnp.einsum('ij,bjk->bik', x, weights[0]) + biases[0]
    h = h * jax.nn.sigmoid(h)
    for w, b in zip(weights[1:-1], biases[1:-1]):
        h = jnp.einsum('bij,bjk->bik', h, w) + b
        h = h * jax.nn.sigmoid(h)
    h = jnp.einsum('bij,bjk->bik', h, weights[-1]) + biases[-1]
    mu, lv = jnp.split(h, 2, axis=-1)
    lv = max_logvar - jax.nn.softplus(max_logvar - lv)
    lv = min_logvar + jax.nn.softplus(lv - min_logvar)
    return mu, lv


# ----------------------------------------------------------------------------
if __name__ == "__main__":
    obs_dim, act_dim = 11, 3
    hidden = (32, 32)
    ensemble_size = 7
    out_half = obs_dim + 1

    key = jax.random.PRNGKey(0)
    key, kx_small, kx_big = jax.random.split(key, 3)

    weights, biases, min_lv, max_lv = init_params(
        key, obs_dim, act_dim, hidden, ensemble_size, with_reward=True)
    packed = pack_ensemble_params(weights, biases, min_lv, max_lv)

    # --- small batch (single-block path) ---
    x_small = jax.random.normal(kx_small, (8, obs_dim + act_dim), dtype=jnp.float32)
    mu, logvar = ensemble_mlp_forward(x_small, packed)
    jax.block_until_ready((mu, logvar))
    mu_ref, lv_ref = reference_forward(x_small, weights, biases, min_lv, max_lv)
    assert mu.shape == (ensemble_size, 8, out_half)
    assert logvar.shape == (ensemble_size, 8, out_half)
    np.testing.assert_allclose(np.asarray(mu), np.asarray(mu_ref),
                               rtol=1e-5, atol=1e-5)
    np.testing.assert_allclose(np.asarray(logvar), np.asarray(lv_ref),
                               rtol=1e-5, atol=1e-5)

    # --- larger batch exercising the tiled N grid (non-multiple of tile_n) ---
    x_big = jax.random.normal(kx_big, (1000, obs_dim + act_dim), dtype=jnp.float32)
    mu2, logvar2 = ensemble_mlp_forward(x_big, packed, tile_n=512)
    jax.block_until_ready((mu2, logvar2))
    mu2_ref, lv2_ref = reference_forward(x_big, weights, biases, min_lv, max_lv)
    assert mu2.shape == (ensemble_size, 1000, out_half)
    assert logvar2.shape == (ensemble_size, 1000, out_half)
    np.testing.assert_allclose(np.asarray(mu2), np.asarray(mu2_ref),
                               rtol=1e-5, atol=1e-5)
    np.testing.assert_allclose(np.asarray(logvar2), np.asarray(lv2_ref),
                               rtol=1e-5, atol=1e-5)

    print("KERNEL_OK")
</pallas_src>

<mosaic_0001>
module attributes {stable_mosaic.version = 11 : i64} {
  func.func @kernel(%arg0: i32, %arg1: memref<8x14xf32, #tpu.memory_space<vmem>>, %arg2: memref<14x256xf32, #tpu.memory_space<vmem>>, %arg3: memref<2x256x256xf32, #tpu.memory_space<vmem>>, %arg4: memref<8x256xf32, #tpu.memory_space<vmem>>, %arg5: memref<8x256xf32, #tpu.memory_space<vmem>>) attributes {dimension_semantics = [#tpu.dimension_semantics<parallel>], iteration_bounds = array<i64: 1>, scalar_prefetch = 0 : i64, scratch_operands = 0 : i64, tpu.core_type = #tpu.core_type<tc>, window_params = [{transform_indices = @transform_0, window_bounds = array<i64: 8, 14>}, {pipeline_mode = #tpu.pipeline_mode<synchronous>, transform_indices = @transform_1, window_bounds = array<i64: 14, 256>}, {pipeline_mode = #tpu.pipeline_mode<synchronous>, transform_indices = @transform_2, window_bounds = array<i64: 2, 256, 256>}, {pipeline_mode = #tpu.pipeline_mode<synchronous>, transform_indices = @transform_3, window_bounds = array<i64: 8, 256>}, {transform_indices = @transform_4, window_bounds = array<i64: 8, 256>}]} {
    %c0 = arith.constant 0 : index
    %c0_0 = arith.constant 0 : index
    %0 = vector.load %arg1[%c0, %c0_0] : memref<8x14xf32, #tpu.memory_space<vmem>>, vector<8x14xf32>
    %c0_1 = arith.constant 0 : index
    %c0_2 = arith.constant 0 : index
    %1 = vector.load %arg2[%c0_1, %c0_2] : memref<14x256xf32, #tpu.memory_space<vmem>>, vector<14x256xf32>
    %cst = arith.constant dense<0.000000e+00> : vector<8x256xf32>
    %2 = tpu.matmul %0, %1, %cst {dimension_numbers = #tpu.dot_dimension_numbers<[1], [0], [0], [1], [0, 0, 1, 1], [], []>} : vector<8x14xf32>, vector<14x256xf32>, vector<8x256xf32> -> vector<8x256xf32>
    %c0_3 = arith.constant 0 : index
    %c0_4 = arith.constant 0 : index
    %3 = vector.load %arg4[%c0_3, %c0_4] : memref<8x256xf32, #tpu.memory_space<vmem>>, vector<1x256xf32>
    %4 = vector.broadcast %3 : vector<1x256xf32> to vector<8x256xf32>
    %5 = arith.addf %2, %4 : vector<8x256xf32>
    %6 = arith.negf %5 : vector<8x256xf32>
    %7 = math.exp %6 : vector<8x256xf32>
    %cst_5 = arith.constant 1.000000e+00 : f32
    %8 = vector.broadcast %cst_5 : f32 to vector<8x256xf32>
    %9 = arith.addf %8, %7 : vector<8x256xf32>
    %10 = arith.divf %8, %9 : vector<8x256xf32>
    %11 = arith.mulf %5, %10 : vector<8x256xf32>
    %c0_6 = arith.constant 0 : index
    %c0_7 = arith.constant 0 : index
    %c0_8 = arith.constant 0 : index
    %12 = vector.load %arg3[%c0_6, %c0_7, %c0_8] : memref<2x256x256xf32, #tpu.memory_space<vmem>>, vector<1x256x256xf32>
    %13 = vector.shape_cast %12 : vector<1x256x256xf32> to vector<256x256xf32>
    %cst_9 = arith.constant dense<0.000000e+00> : vector<8x256xf32>
    %14 = tpu.matmul %11, %13, %cst_9 {dimension_numbers = #tpu.dot_dimension_numbers<[1], [0], [0], [1], [0, 0, 1, 1], [], []>} : vector<8x256xf32>, vector<256x256xf32>, vector<8x256xf32> -> vector<8x256xf32>
    %c1 = arith.constant 1 : index
    %c0_10 = arith.constant 0 : index
    %15 = vector.load %arg4[%c1, %c0_10] : memref<8x256xf32, #tpu.memory_space<vmem>>, vector<1x256xf32>
    %16 = vector.broadcast %15 : vector<1x256xf32> to vector<8x256xf32>
    %17 = arith.addf %14, %16 : vector<8x256xf32>
    %18 = arith.negf %17 : vector<8x256xf32>
    %19 = math.exp %18 : vector<8x256xf32>
    %cst_11 = arith.constant 1.000000e+00 : f32
    %20 = vector.broadcast %cst_11 : f32 to vector<8x256xf32>
    %21 = arith.addf %20, %19 : vector<8x256xf32>
    %22 = arith.divf %20, %21 : vector<8x256xf32>
    %23 = arith.mulf %17, %22 : vector<8x256xf32>
    %c1_12 = arith.constant 1 : index
    %c0_13 = arith.constant 0 : index
    %c0_14 = arith.constant 0 : index
    %24 = vector.load %arg3[%c1_12, %c0_13, %c0_14] : memref<2x256x256xf32, #tpu.memory_space<vmem>>, vector<1x256x256xf32>
    %25 = vector.shape_cast %24 : vector<1x256x256xf32> to vector<256x256xf32>
    %cst_15 = arith.constant dense<0.000000e+00> : vector<8x256xf32>
    %26 = tpu.matmul %23, %25, %cst_15 {dimension_numbers = #tpu.dot_dimension_numbers<[1], [0], [0], [1], [0, 0, 1, 1], [], []>} : vector<8x256xf32>, vector<256x256xf32>, vector<8x256xf32> -> vector<8x256xf32>
    %c2 = arith.constant 2 : index
    %c0_16 = arith.constant 0 : index
    %27 = vector.load %arg4[%c2, %c0_16] : memref<8x256xf32, #tpu.memory_space<vmem>>, vector<1x256xf32>
    %28 = vector.broadcast %27 : vector<1x256xf32> to vector<8x256xf32>
    %29 = arith.addf %26, %28 : vector<8x256xf32>
    %30 = vector.extract_strided_slice %29 {offsets = [0, 128], sizes = [8, 128], strides = [1, 1]} : vector<8x256xf32> to vector<8x128xf32>
    %c3 = arith.constant 3 : index
    %c128 = arith.constant 128 : index
    %31 = vector.load %arg4[%c3, %c128] : memref<8x256xf32, #tpu.memory_space<vmem>>, vector<1x128xf32>
    %c4 = arith.constant 4 : index
    %c128_17 = arith.constant 128 : index
    %32 = vector.load %arg4[%c4, %c128_17] : memref<8x256xf32, #tpu.memory_space<vmem>>, vector<1x128xf32>
    %33 = vector.broadcast %31 : vector<1x128xf32> to vector<8x128xf32>
    %34 = arith.subf %33, %30 : vector<8x128xf32>
    %cst_18 = arith.constant 0.000000e+00 : f32
    %35 = vector.broadcast %cst_18 : f32 to vector<8x128xf32>
    %36 = arith.maximumf %34, %35 : vector<8x128xf32>
    %37 = vector.broadcast %cst_18 : f32 to vector<8x128xf32>
    %38 = arith.subf %34, %37 : vector<8x128xf32>
    %39 = arith.cmpf one, %38, %38 : vector<8x128xf32>
    %40 = vector.broadcast %cst_18 : f32 to vector<8x128xf32>
    %41 = arith.addf %34, %40 : vector<8x128xf32>
    %42 = math.absf %38 : vector<8x128xf32>
    %cst_19 = arith.constant 0.000000e+00 : f32
    %43 = vector.broadcast %cst_19 : f32 to vector<8x128xf32>
    %44 = arith.subf %43, %42 : vector<8x128xf32>
    %45 = math.exp %44 : vector<8x128xf32>
    %46 = math.log1p %45 : vector<8x128xf32>
    %47 = arith.addf %36, %46 : vector<8x128xf32>
    %48 = arith.select %39, %41, %47 : vector<8x128xi1>, vector<8x128xf32>
    %49 = vector.broadcast %31 : vector<1x128xf32> to vector<8x128xf32>
    %50 = arith.subf %49, %48 : vector<8x128xf32>
    %51 = vector.broadcast %32 : vector<1x128xf32> to vector<8x128xf32>
    %52 = arith.subf %50, %51 : vector<8x128xf32>
    %cst_20 = arith.constant 0.000000e+00 : f32
    %53 = vector.broadcast %cst_20 : f32 to vector<8x128xf32>
    %54 = arith.maximumf %52, %53 : vector<8x128xf32>
    %55 = vector.broadcast %cst_20 : f32 to vector<8x128xf32>
    %56 = arith.subf %52, %55 : vector<8x128xf32>
    %57 = arith.cmpf one, %56, %56 : vector<8x128xf32>
    %58 = vector.broadcast %cst_20 : f32 to vector<8x128xf32>
    %59 = arith.addf %52, %58 : vector<8x128xf32>
    %60 = math.absf %56 : vector<8x128xf32>
    %cst_21 = arith.constant 0.000000e+00 : f32
    %61 = vector.broadcast %cst_21 : f32 to vector<8x128xf32>
    %62 = arith.subf %61, %60 : vector<8x128xf32>
    %63 = math.exp %62 : vector<8x128xf32>
    %64 = math.log1p %63 : vector<8x128xf32>
    %65 = arith.addf %54, %64 : vector<8x128xf32>
    %66 = arith.select %57, %59, %65 : vector<8x128xi1>, vector<8x128xf32>
    %67 = vector.broadcast %32 : vector<1x128xf32> to vector<8x128xf32>
    %68 = arith.addf %67, %66 : vector<8x128xf32>
    %69 = vector.extract_strided_slice %29 {offsets = [0, 0], sizes = [8, 128], strides = [1, 1]} : vector<8x256xf32> to vector<8x128xf32>
    %c0_22 = arith.constant 0 : index
    %c0_23 = arith.constant 0 : index
    %70 = vector.load %arg5[%c0_22, %c0_23] : memref<8x256xf32, #tpu.memory_space<vmem>>, vector<8x128xf32>
    tpu.vector_store %arg5[%c0_22, %c0_23], %69 {strides = array<i32>} : memref<8x256xf32, #tpu.memory_space<vmem>>, vector<8x128xf32>,
    %c0_24 = arith.constant 0 : index
    %c128_25 = arith.constant 128 : index
    %71 = vector.load %arg5[%c0_24, %c128_25] : memref<8x256xf32, #tpu.memory_space<vmem>>, vector<8x128xf32>
    tpu.vector_store %arg5[%c0_24, %c128_25], %68 {strides = array<i32>} : memref<8x256xf32, #tpu.memory_space<vmem>>, vector<8x128xf32>,
    return
  }
  func.func @transform_0(%arg0: i32) -> (i32, i32) {
    %c0_i32 = arith.constant 0 : i32
    %c0_i32_0 = arith.constant 0 : i32
    return %arg0, %c0_i32 : i32, i32
  }
  func.func @transform_1(%arg0: i32) -> (i32, i32) {
    %c0_i32 = arith.constant 0 : i32
    %c0_i32_0 = arith.constant 0 : i32
    %c0_i32_1 = arith.constant 0 : i32
    return %c0_i32, %c0_i32_0 : i32, i32
  }
  func.func @transform_2(%arg0: i32) -> (i32, i32, i32) {
    %c0_i32 = arith.constant 0 : i32
    %c0_i32_0 = arith.constant 0 : i32
    %c0_i32_1 = arith.constant 0 : i32
    %c0_i32_2 = arith.constant 0 : i32
    return %c0_i32, %c0_i32_0, %c0_i32_1 : i32, i32, i32
  }
  func.func @transform_3(%arg0: i32) -> (i32, i32) {
    %c0_i32 = arith.constant 0 : i32
    %c0_i32_0 = arith.constant 0 : i32
    %c0_i32_1 = arith.constant 0 : i32
    return %c0_i32, %c0_i32_0 : i32, i32
  }
  func.func @transform_4(%arg0: i32) -> (i32, i32) {
    %c0_i32 = arith.constant 0 : i32
    %c0_i32_0 = arith.constant 0 : i32
    return %arg0, %c0_i32 : i32, i32
  }
}

</mosaic_0001>

<llo_original>
// kernel: tpu_custom_call.1
$region0: #{tpu_custom_call.1}
  #allocation0 [shape = 'u32[]', space=smem, size = 0x4, offset = 0x4, fixed_abs, tag = 'smem constant byte address 0x4 - core index']
  #allocation1 [shape = 'u32[144,128]{1,0:T(1,128)}', space=vmem, size = 0x12000, scoped, tag = 'internal scratch']
  %s0 = inlined_call_operand.hbm [shape: f32[8,14], index: 0, kind: input, shape index: {}]
  %s1 = inlined_call_operand.hbm [shape: f32[14,256], index: 1, kind: input, shape index: {}]
  %s2 = inlined_call_operand.hbm [shape: f32[2,256,256], index: 2, kind: input, shape index: {}]
  %s3 = inlined_call_operand.hbm [shape: f32[8,256], index: 3, kind: input, shape index: {}]
  %s4 = inlined_call_operand.hbm [shape: f32[8,256], index: 4, kind: output, shape index: {}]
  %s5 = sld [smem:[#allocation0]]
  $region42: #{tpu_custom_call.1} parent=0
    _
  %s7 = ssub.s32 1, %s5
  %s8 = scalar_select 0, %s7, %s5
  $region1: #{tpu_custom_call.1} parent=0
    #allocation2 [shape = 'u8[4096]{0}', space=vmem, size = 0x1000, scoped, tag = 'input window, operand 0, single buffered']
    #allocation3 [shape = 's32[1]{0}', space=sflag, size = 0x4, scoped, tag = 'scoped memory for tpu_custom_call.1']
    #allocation4 [shape = 's32[1]{0}', space=sflag, size = 0x4, scoped, tag = 'scoped memory for tpu_custom_call.1']
    #allocation5 [shape = 'u8[16384]{0}', space=vmem, size = 0x4000, scoped, tag = 'input window, operand 1, single buffered']
    #allocation6 [shape = 's32[1]{0}', space=sflag, size = 0x4, scoped, tag = 'scoped memory for tpu_custom_call.1']
    #allocation7 [shape = 'u8[524288]{0}', space=vmem, size = 0x80000, scoped, tag = 'input window, operand 2, single buffered']
    #allocation8 [shape = 'u8[8192]{0}', space=vmem, size = 0x2000, scoped, tag = 'input window, operand 3, single buffered']
    #allocation9 [shape = 's32[1]{0}', space=sflag, size = 0x4, scoped, tag = 'scoped memory for tpu_custom_call.1']
    #allocation10 [shape = 'u8[8192]{0}', space=vmem, size = 0x2000, scoped, tag = 'output window, operand 0, single buffered']
    %9 = vsyncpa [#allocation3], 0
    %10 = vsyncpa [#allocation6], 0
    %11 = vsyncpa [#allocation9], 0
    %12 = vsyncpa [#allocation4], 0
    // Predicated region
    $region2: #{tpu_custom_call.1} parent=1 // pred_check
      _
    $region3: #{tpu_custom_call.1} parent=1 // pred_check_branch
      %14 = sbr.rel (0) target = $region5
    $region4: #{tpu_custom_call.1} parent=1 // pred_region
      %s16 = ssub.s32 128, 128
      %17 = vsyncadd [#allocation3], %s16
      %s19 = sshll.u32 [#allocation2], 4
      %s20 = int_to_ptr.vmem [resolvable:$true] %s19
      %22 = dma.hbm_to_vmem [thread:$0]  %s0, 128, %s20, [#allocation3]
    $region5: #{tpu_custom_call.1} parent=1 // pred_fallthru
      _
    // Predicated region
    $region6: #{tpu_custom_call.1} parent=1 // pred_check
      _
    $region7: #{tpu_custom_call.1} parent=1 // pred_check_branch
      %24 = sbr.rel (0) target = $region9
    $region8: #{tpu_custom_call.1} parent=1 // pred_region
      %s26 = ssub.s32 512, 512
      %27 = vsyncadd [#allocation6], %s26
      %s28 = sshll.u32 [#allocation5], 4
      %s29 = int_to_ptr.vmem [resolvable:$true] %s28
      %34 = dma.hbm_to_vmem [thread:$0]  %s1, 512, %s29, [#allocation6], 256, 256, 16
    $region9: #{tpu_custom_call.1} parent=1 // pred_fallthru
      _
    // Predicated region
    $region10: #{tpu_custom_call.1} parent=1 // pred_check
      _
    $region11: #{tpu_custom_call.1} parent=1 // pred_check_branch
      %36 = sbr.rel (0) target = $region13
    $region12: #{tpu_custom_call.1} parent=1 // pred_region
      %s38 = ssub.s32 16384, 16384
      %39 = vsyncadd [#allocation6], %s38
      %s40 = sshll.u32 [#allocation7], 4
      %s41 = int_to_ptr.vmem [resolvable:$true] %s40
      %46 = dma.hbm_to_vmem [thread:$0]  %s2, 16384, %s41, [#allocation6], 256, 256, 16
    $region13: #{tpu_custom_call.1} parent=1 // pred_fallthru
      _
    // Predicated region
    $region14: #{tpu_custom_call.1} parent=1 // pred_check
      _
    $region15: #{tpu_custom_call.1} parent=1 // pred_check_branch
      %48 = sbr.rel (0) target = $region17
    $region16: #{tpu_custom_call.1} parent=1 // pred_region
      %s50 = ssub.s32 256, 256
      %51 = vsyncadd [#allocation9], %s50
      %s53 = sshll.u32 [#allocation8], 4
      %s54 = int_to_ptr.vmem [resolvable:$true] %s53
      %56 = dma.hbm_to_vmem [thread:$0]  %s3, 256, %s54, [#allocation9]
    $region17: #{tpu_custom_call.1} parent=1 // pred_fallthru
      _
    // Predicated region
    $region18: #{tpu_custom_call.1} parent=1 // pred_check
      _
    $region19: #{tpu_custom_call.1} parent=1 // pred_check_branch
      %58 = sbr.rel (0) target = $region21
    $region20: #{tpu_custom_call.1} parent=1 // pred_region
      %59 = dma.done [#allocation3], 128
    $region21: #{tpu_custom_call.1} parent=1 // pred_fallthru
      _
    // Predicated region
    $region22: #{tpu_custom_call.1} parent=1 // pred_check
      _
    $region23: #{tpu_custom_call.1} parent=1 // pred_check_branch
      %61 = sbr.rel (0) target = $region25
    $region24: #{tpu_custom_call.1} parent=1 // pred_region
      %62 = dma.done [#allocation6], 512
    $region25: #{tpu_custom_call.1} parent=1 // pred_fallthru
      _
    // Predicated region
    $region26: #{tpu_custom_call.1} parent=1 // pred_check
      _
    $region27: #{tpu_custom_call.1} parent=1 // pred_check_branch
      %64 = sbr.rel (0) target = $region29
    $region28: #{tpu_custom_call.1} parent=1 // pred_region
      %65 = dma.done [#allocation6], 16384
    $region29: #{tpu_custom_call.1} parent=1 // pred_fallthru
      _
    // Predicated region
    $region30: #{tpu_custom_call.1} parent=1 // pred_check
      _
    $region31: #{tpu_custom_call.1} parent=1 // pred_check_branch
      %67 = sbr.rel (0) target = $region33
    $region32: #{tpu_custom_call.1} parent=1 // pred_region
      %68 = dma.done [#allocation9], 256
    $region33: #{tpu_custom_call.1} parent=1 // pred_fallthru
      _
    %v69 = vld [vmem:[#allocation2] sm:$0xff]
    %v70 = vld [vmem:[#allocation5] sm:$0xff]
    %v71 = vld [vmem:[#allocation5 + $0x8] sm:$0xff]
    %v72 = vld [vmem:[#allocation5 + $0x10] sm:$0x3f]
    %v73 = vld [vmem:[#allocation5 + $0x18] sm:$0x3f]
    %v74 = vld [vmem:[#allocation8] ss:$8 sm:$0x3]
    %v76 = vlaneseq
    %v77 = vshrl.u32 %v76, 7
    %v78 = vsub.s32 0, %v77
    %v79 = vrot.slane %v74, %v78
    %v80 = vlaneseq
    %v81 = vshrl.u32 %v80, 7
    %v82 = vsub.s32 1, %v81
    %v83 = vrot.slane %v74, %v82
    %vm86 = vcmask 113664
    %v88 = vsel %vm86, %v69, 0
    %vm90 = vcmask 1045504
    %v92 = vsel %vm90, %v72, 0
    %v95 = vsel %vm90, %v73, 0
    %97 = vmatprep.subr.mxu0 %v71
    %98 = vmatpush1.msra.mxu0 %v70
    %99 = vmatprep.subr.mxu0 %v95
    %100 = vmatpush1.msra.mxu0 %v92
    %101 = vmatprep.subr.mxu0 0.0
    %102 = vmatpush1.msra.mxu0 0.0
    %103 = vmatprep.subr.mxu0 0.0
    %104 = vmatpush1.msra.mxu0 0.0
    %105 = vmatprep.subr.mxu0 0.0
    %106 = vmatpush1.msra.mxu0 0.0
    %107 = vmatprep.subr.mxu0 0.0
    %108 = vmatpush1.msra.mxu0 0.0
    %109 = vmatprep.subr.mxu0 0.0
    %110 = vmatpush1.msra.mxu0 0.0
    %111 = vmatprep.subr.mxu0 0.0
    %112 = vmatpush1.msra.mxu0 0.0
    %113 = vmatprep.subr.mxu0 0.0
    %114 = vmatpush1.msra.mxu0 0.0
    %115 = vmatprep.subr.mxu0 0.0
    %116 = vmatpush1.msra.mxu0 0.0
    %117 = vmatprep.subr.mxu0 0.0
    %118 = vmatpush1.msra.mxu0 0.0
    %119 = vmatprep.subr.mxu0 0.0
    %120 = vmatpush1.msra.mxu0 0.0
    %121 = vmatprep.subr.mxu0 0.0
    %122 = vmatpush1.msra.mxu0 0.0
    %123 = vmatprep.subr.mxu0 0.0
    %124 = vmatpush1.msra.mxu0 0.0
    %125 = vmatprep.subr.mxu0 0.0
    %126 = vmatpush1.msra.mxu0 0.0
    %127 = vmatprep.subr.mxu0 0.0
    %128 = vmatpush1.msra.mxu0 0.0
    %129 = vmatprep.subr.mxu0 0.0
    %130 = vmatpush1.msra.mxu0 0.0
    %131 = vmatprep.subr.mxu0 0.0
    %132 = vmatpush1.msra.mxu0 0.0
    %133 = vmatprep.subr.mxu0 0.0
    %134 = vmatpush1.msra.mxu0 0.0
    %135 = vmatprep.subr.mxu0 0.0
    %136 = vmatpush1.msra.mxu0 0.0
    %137 = vmatprep.subr.mxu0 0.0
    %138 = vmatpush1.msra.mxu0 0.0
    %139 = vmatprep.subr.mxu0 0.0
    %140 = vmatpush1.msra.mxu0 0.0
    %141 = vmatprep.subr.mxu0 0.0
    %142 = vmatpush1.msra.mxu0 0.0
    %143 = vmatprep.subr.mxu0 0.0
    %144 = vmatpush1.msra.mxu0 0.0
    %145 = vmatprep.subr.mxu0 0.0
    %146 = vmatpush1.msra.mxu0 0.0
    %147 = vmatprep.subr.mxu0 0.0
    %148 = vmatpush1.msra.mxu0 0.0
    %149 = vmatprep.subr.mxu0 0.0
    %150 = vmatpush1.msra.mxu0 0.0
    %151 = vmatprep.subr.mxu0 0.0
    %152 = vmatpush1.msra.mxu0 0.0
    %153 = vmatprep.subr.mxu0 0.0
    %154 = vmatpush1.msra.mxu0 0.0
    %155 = vmatprep.subr.mxu0 0.0
    %156 = vmatpush1.msra.mxu0 0.0
    %157 = vmatprep.subr.mxu0 0.0
    %158 = vmatpush1.msra.mxu0 0.0
    %159 = vmatprep.subr.mxu0 0.0
    %160 = vmatpush1.msra.mxu0 0.0
    %161 = vmatprep.mubr.f32.mxu0 0.0
    %162 = vmatmul.mubr.f32.gmra.mrb[0].mxu0 %v88
    %v163 = vpop.f32.mrb[0].mxu0
    %v164 = vadd.f32 %v79, %v163
    %v165 = vpop.f32.mrb[0].mxu0
    %v166 = vadd.f32 %v83, %v165
    %167 = vdwg.mxu0
    %v168 = vxor.u32 %v164, 2147483648
    %v169 = vxor.u32 %v166, 2147483648
    %v170 = vmul.f32 %v168, 1.442695
    %v171 = vpow.pop %v170
    %v172 = vmul.f32 %v169, 1.442695
    %v173 = vpow.pop %v172
    %v174 = vadd.f32 %v171, 1.0
    %v175 = vadd.f32 %v173, 1.0
    %v176 = vrcp.pop %v174
    %v177 = vmul.f32 1.0, %v176
    %v178 = vrcp.pop %v175
    %v179 = vmul.f32 1.0, %v178
    %v180 = vmul.f32 %v164, %v177
    %v181 = vmul.f32 %v166, %v179
    %v182 = vld [vmem:[#allocation7] sm:$0xff]
    %v183 = vld [vmem:[#allocation7 + $0x8] sm:$0xff]
    %v184 = vld [vmem:[#allocation7 + $0x10] sm:$0xff]
    %v185 = vld [vmem:[#allocation7 + $0x18] sm:$0xff]
    %v186 = vld [vmem:[#allocation7 + $0x20] sm:$0xff]
    %v187 = vld [vmem:[#allocation7 + $0x28] sm:$0xff]
    %v188 = vld [vmem:[#allocation7 + $0x30] sm:$0xff]
    %v189 = vld [vmem:[#allocation7 + $0x38] sm:$0xff]
    %v190 = vld [vmem:[#allocation7 + $0x40] sm:$0xff]
    %v191 = vld [vmem:[#allocation7 + $0x48] sm:$0xff]
    %v192 = vld [vmem:[#allocation7 + $0x50] sm:$0xff]
    %v193 = vld [vmem:[#allocation7 + $0x58] sm:$0xff]
    %v194 = vld [vmem:[#allocation7 + $0x60] sm:$0xff]
    %v195 = vld [vmem:[#allocation7 + $0x68] sm:$0xff]
    %v196 = vld [vmem:[#allocation7 + $0x70] sm:$0xff]
    %v197 = vld [vmem:[#allocation7 + $0x78] sm:$0xff]
    %v198 = vld [vmem:[#allocation7 + $0x80] sm:$0xff]
    %v199 = vld [vmem:[#allocation7 + $0x88] sm:$0xff]
    %v200 = vld [vmem:[#allocation7 + $0x90] sm:$0xff]
    %v201 = vld [vmem:[#allocation7 + $0x98] sm:$0xff]
    %v202 = vld [vmem:[#allocation7 + $0xa0] sm:$0xff]
    %v203 = vld [vmem:[#allocation7 + $0xa8] sm:$0xff]
    %v204 = vld [vmem:[#allocation7 + $0xb0] sm:$0xff]
    %v205 = vld [vmem:[#allocation7 + $0xb8] sm:$0xff]
    %v206 = vld [vmem:[#allocation7 + $0xc0] sm:$0xff]
    %v207 = vld [vmem:[#allocation7 + $0xc8] sm:$0xff]
    %v208 = vld [vmem:[#allocation7 + $0xd0] sm:$0xff]
    %v209 = vld [vmem:[#allocation7 + $0xd8] sm:$0xff]
    %v210 = vld [vmem:[#allocation7 + $0xe0] sm:$0xff]
    %v211 = vld [vmem:[#allocation7 + $0xe8] sm:$0xff]
    %v212 = vld [vmem:[#allocation7 + $0xf0] sm:$0xff]
    %v213 = vld [vmem:[#allocation7 + $0xf8] sm:$0xff]
    %v214 = vld [vmem:[#allocation7 + $0x100] sm:$0xff]
    %v215 = vld [vmem:[#allocation7 + $0x108] sm:$0xff]
    %v216 = vld [vmem:[#allocation7 + $0x110] sm:$0xff]
    %v217 = vld [vmem:[#allocation7 + $0x118] sm:$0xff]
    %v218 = vld [vmem:[#allocation7 + $0x120] sm:$0xff]
    %v219 = vld [vmem:[#allocation7 + $0x128] sm:$0xff]
    %v220 = vld [vmem:[#allocation7 + $0x130] sm:$0xff]
    %v221 = vld [vmem:[#allocation7 + $0x138] sm:$0xff]
    %v222 = vld [vmem:[#allocation7 + $0x140] sm:$0xff]
    %v223 = vld [vmem:[#allocation7 + $0x148] sm:$0xff]
    %v224 = vld [vmem:[#allocation7 + $0x150] sm:$0xff]
    %v225 = vld [vmem:[#allocation7 + $0x158] sm:$0xff]
    %v226 = vld [vmem:[#allocation7 + $0x160] sm:$0xff]
    %v227 = vld [vmem:[#allocation7 + $0x168] sm:$0xff]
    %v228 = vld [vmem:[#allocation7 + $0x170] sm:$0xff]
    %v229 = vld [vmem:[#allocation7 + $0x178] sm:$0xff]
    %v230 = vld [vmem:[#allocation7 + $0x180] sm:$0xff]
    %v231 = vld [vmem:[#allocation7 + $0x188] sm:$0xff]
    %v232 = vld [vmem:[#allocation7 + $0x190] sm:$0xff]
    %v233 = vld [vmem:[#allocation7 + $0x198] sm:$0xff]
    %v234 = vld [vmem:[#allocation7 + $0x1a0] sm:$0xff]
    %v235 = vld [vmem:[#allocation7 + $0x1a8] sm:$0xff]
    %v236 = vld [vmem:[#allocation7 + $0x1b0] sm:$0xff]
    %v237 = vld [vmem:[#allocation7 + $0x1b8] sm:$0xff]
    %v238 = vld [vmem:[#allocation7 + $0x1c0] sm:$0xff]
    %v239 = vld [vmem:[#allocation7 + $0x1c8] sm:$0xff]
    %v240 = vld [vmem:[#allocation7 + $0x1d0] sm:$0xff]
    %v241 = vld [vmem:[#allocation7 + $0x1d8] sm:$0xff]
    %v242 = vld [vmem:[#allocation7 + $0x1e0] sm:$0xff]
    %v243 = vld [vmem:[#allocation7 + $0x1e8] sm:$0xff]
    %v244 = vld [vmem:[#allocation7 + $0x1f0] sm:$0xff]
    %v245 = vld [vmem:[#allocation7 + $0x1f8] sm:$0xff]
    %s246 = scalar_lea.vmem [#allocation8], 1
    %v247 = vld [vmem:[%s246] ss:$8 sm:$0x3]
    %v249 = vlaneseq
    %v250 = vshrl.u32 %v249, 7
    %v251 = vsub.s32 0, %v250
    %v252 = vrot.slane %v247, %v251
    %v253 = vlaneseq
    %v254 = vshrl.u32 %v253, 7
    %v255 = vsub.s32 1, %v254
    %v256 = vrot.slane %v247, %v255
    %259 = vmatprep.subr.mxu0 %v183
    %260 = vmatpush1.msra.mxu0 %v182
    %261 = vmatprep.subr.mxu0 %v185
    %262 = vmatpush1.msra.mxu0 %v184
    %263 = vmatprep.subr.mxu0 %v187
    %264 = vmatpush1.msra.mxu0 %v186
    %265 = vmatprep.subr.mxu0 %v189
    %266 = vmatpush1.msra.mxu0 %v188
    %267 = vmatprep.subr.mxu0 %v191
    %268 = vmatpush1.msra.mxu0 %v190
    %269 = vmatprep.subr.mxu0 %v193
    %270 = vmatpush1.msra.mxu0 %v192
    %271 = vmatprep.subr.mxu0 %v195
    %272 = vmatpush1.msra.mxu0 %v194
    %273 = vmatprep.subr.mxu0 %v197
    %274 = vmatpush1.msra.mxu0 %v196
    %275 = vmatprep.subr.mxu0 %v199
    %276 = vmatpush1.msra.mxu0 %v198
    %277 = vmatprep.subr.mxu0 %v201
    %278 = vmatpush1.msra.mxu0 %v200
    %279 = vmatprep.subr.mxu0 %v203
    %280 = vmatpush1.msra.mxu0 %v202
    %281 = vmatprep.subr.mxu0 %v205
    %282 = vmatpush1.msra.mxu0 %v204
    %283 = vmatprep.subr.mxu0 %v207
    %284 = vmatpush1.msra.mxu0 %v206
    %285 = vmatprep.subr.mxu0 %v209
    %286 = vmatpush1.msra.mxu0 %v208
    %287 = vmatprep.subr.mxu0 %v211
    %288 = vmatpush1.msra.mxu0 %v210
    %289 = vmatprep.subr.mxu0 %v213
    %290 = vmatpush1.msra.mxu0 %v212
    %291 = vmatprep.subr.mxu0 %v215
    %292 = vmatpush1.msra.mxu0 %v214
    %293 = vmatprep.subr.mxu0 %v217
    %294 = vmatpush1.msra.mxu0 %v216
    %295 = vmatprep.subr.mxu0 %v219
    %296 = vmatpush1.msra.mxu0 %v218
    %297 = vmatprep.subr.mxu0 %v221
    %298 = vmatpush1.msra.mxu0 %v220
    %299 = vmatprep.subr.mxu0 %v223
    %300 = vmatpush1.msra.mxu0 %v222
    %301 = vmatprep.subr.mxu0 %v225
    %302 = vmatpush1.msra.mxu0 %v224
    %303 = vmatprep.subr.mxu0 %v227
    %304 = vmatpush1.msra.mxu0 %v226
    %305 = vmatprep.subr.mxu0 %v229
    %306 = vmatpush1.msra.mxu0 %v228
    %307 = vmatprep.subr.mxu0 %v231
    %308 = vmatpush1.msra.mxu0 %v230
    %309 = vmatprep.subr.mxu0 %v233
    %310 = vmatpush1.msra.mxu0 %v232
    %311 = vmatprep.subr.mxu0 %v235
    %312 = vmatpush1.msra.mxu0 %v234
    %313 = vmatprep.subr.mxu0 %v237
    %314 = vmatpush1.msra.mxu0 %v236
    %315 = vmatprep.subr.mxu0 %v239
    %316 = vmatpush1.msra.mxu0 %v238
    %317 = vmatprep.subr.mxu0 %v241
    %318 = vmatpush1.msra.mxu0 %v240
    %319 = vmatprep.subr.mxu0 %v243
    %320 = vmatpush1.msra.mxu0 %v242
    %321 = vmatprep.subr.mxu0 %v245
    %322 = vmatpush1.msra.mxu0 %v244
    %323 = vmatprep.mubr.f32.mxu0 %v181
    %324 = vmatmul.mubr.f32.gmra.mrb[0].mxu0 %v180
    %v325 = vpop.f32.mrb[0].mxu0
    %v326 = vadd.f32 %v252, %v325
    %v327 = vpop.f32.mrb[0].mxu0
    %v328 = vadd.f32 %v256, %v327
    %329 = vdwg.mxu0
    %v330 = vxor.u32 %v326, 2147483648
    %v331 = vxor.u32 %v328, 2147483648
    %v332 = vmul.f32 %v330, 1.442695
    %v333 = vpow.pop %v332
    %v334 = vmul.f32 %v331, 1.442695
    %v335 = vpow.pop %v334
    %v336 = vadd.f32 %v333, 1.0
    %v337 = vadd.f32 %v335, 1.0
    %v338 = vrcp.pop %v336
    %v339 = vmul.f32 1.0, %v338
    %v340 = vrcp.pop %v337
    %v341 = vmul.f32 1.0, %v340
    %v342 = vmul.f32 %v326, %v339
    %v343 = vmul.f32 %v328, %v341
    %s344 = scalar_lea.vmem [#allocation7], 512
    %v345 = vld [vmem:[%s344] sm:$0xff]
    %v346 = vld [vmem:[%s344 + $0x8] sm:$0xff]
    %v347 = vld [vmem:[%s344 + $0x10] sm:$0xff]
    %v348 = vld [vmem:[%s344 + $0x18] sm:$0xff]
    %v349 = vld [vmem:[%s344 + $0x20] sm:$0xff]
    %v350 = vld [vmem:[%s344 + $0x28] sm:$0xff]
    %v351 = vld [vmem:[%s344 + $0x30] sm:$0xff]
    %v352 = vld [vmem:[%s344 + $0x38] sm:$0xff]
    %v353 = vld [vmem:[%s344 + $0x40] sm:$0xff]
    %v354 = vld [vmem:[%s344 + $0x48] sm:$0xff]
    %v355 = vld [vmem:[%s344 + $0x50] sm:$0xff]
    %v356 = vld [vmem:[%s344 + $0x58] sm:$0xff]
    %v357 = vld [vmem:[%s344 + $0x60] sm:$0xff]
    %v358 = vld [vmem:[%s344 + $0x68] sm:$0xff]
    %v359 = vld [vmem:[%s344 + $0x70] sm:$0xff]
    %v360 = vld [vmem:[%s344 + $0x78] sm:$0xff]
    %v361 = vld [vmem:[%s344 + $0x80] sm:$0xff]
    %v362 = vld [vmem:[%s344 + $0x88] sm:$0xff]
    %v363 = vld [vmem:[%s344 + $0x90] sm:$0xff]
    %v364 = vld [vmem:[%s344 + $0x98] sm:$0xff]
    %v365 = vld [vmem:[%s344 + $0xa0] sm:$0xff]
    %v366 = vld [vmem:[%s344 + $0xa8] sm:$0xff]
    %v367 = vld [vmem:[%s344 + $0xb0] sm:$0xff]
    %v368 = vld [vmem:[%s344 + $0xb8] sm:$0xff]
    %v369 = vld [vmem:[%s344 + $0xc0] sm:$0xff]
    %v370 = vld [vmem:[%s344 + $0xc8] sm:$0xff]
    %v371 = vld [vmem:[%s344 + $0xd0] sm:$0xff]
    %v372 = vld [vmem:[%s344 + $0xd8] sm:$0xff]
    %v373 = vld [vmem:[%s344 + $0xe0] sm:$0xff]
    %v374 = vld [vmem:[%s344 + $0xe8] sm:$0xff]
    %v375 = vld [vmem:[%s344 + $0xf0] sm:$0xff]
    %v376 = vld [vmem:[%s344 + $0xf8] sm:$0xff]
    %v377 = vld [vmem:[%s344 + $0x100] sm:$0xff]
    %v378 = vld [vmem:[%s344 + $0x108] sm:$0xff]
    %v379 = vld [vmem:[%s344 + $0x110] sm:$0xff]
    %v380 = vld [vmem:[%s344 + $0x118] sm:$0xff]
    %v381 = vld [vmem:[%s344 + $0x120] sm:$0xff]
    %v382 = vld [vmem:[%s344 + $0x128] sm:$0xff]
    %v383 = vld [vmem:[%s344 + $0x130] sm:$0xff]
    %v384 = vld [vmem:[%s344 + $0x138] sm:$0xff]
    %v385 = vld [vmem:[%s344 + $0x140] sm:$0xff]
    %v386 = vld [vmem:[%s344 + $0x148] sm:$0xff]
    %v387 = vld [vmem:[%s344 + $0x150] sm:$0xff]
    %v388 = vld [vmem:[%s344 + $0x158] sm:$0xff]
    %v389 = vld [vmem:[%s344 + $0x160] sm:$0xff]
    %v390 = vld [vmem:[%s344 + $0x168] sm:$0xff]
    %v391 = vld [vmem:[%s344 + $0x170] sm:$0xff]
    %v392 = vld [vmem:[%s344 + $0x178] sm:$0xff]
    %v393 = vld [vmem:[%s344 + $0x180] sm:$0xff]
    %v394 = vld [vmem:[%s344 + $0x188] sm:$0xff]
    %v395 = vld [vmem:[%s344 + $0x190] sm:$0xff]
    %v396 = vld [vmem:[%s344 + $0x198] sm:$0xff]
    %v397 = vld [vmem:[%s344 + $0x1a0] sm:$0xff]
    %v398 = vld [vmem:[%s344 + $0x1a8] sm:$0xff]
    %v399 = vld [vmem:[%s344 + $0x1b0] sm:$0xff]
    %v400 = vld [vmem:[%s344 + $0x1b8] sm:$0xff]
    %v401 = vld [vmem:[%s344 + $0x1c0] sm:$0xff]
    %v402 = vld [vmem:[%s344 + $0x1c8] sm:$0xff]
    %v403 = vld [vmem:[%s344 + $0x1d0] sm:$0xff]
    %v404 = vld [vmem:[%s344 + $0x1d8] sm:$0xff]
    %v405 = vld [vmem:[%s344 + $0x1e0] sm:$0xff]
    %v406 = vld [vmem:[%s344 + $0x1e8] sm:$0xff]
    %v407 = vld [vmem:[%s344 + $0x1f0] sm:$0xff]
    %v408 = vld [vmem:[%s344 + $0x1f8] sm:$0xff]
    %s409 = scalar_lea.vmem [#allocation8], 2
    %v410 = vld [vmem:[%s409] ss:$8 sm:$0x3]
    %v412 = vlaneseq
    %v413 = vshrl.u32 %v412, 7
    %v414 = vsub.s32 0, %v413
    %v415 = vrot.slane %v410, %v414
    %v416 = vlaneseq
    %v417 = vshrl.u32 %v416, 7
    %v418 = vsub.s32 1, %v417
    %v419 = vrot.slane %v410, %v418
    %422 = vmatprep.subr.mxu0 %v346
    %423 = vmatpush1.msra.mxu0 %v345
    %424 = vmatprep.subr.mxu0 %v348
    %425 = vmatpush1.msra.mxu0 %v347
    %426 = vmatprep.subr.mxu0 %v350
    %427 = vmatpush1.msra.mxu0 %v349
    %428 = vmatprep.subr.mxu0 %v352
    %429 = vmatpush1.msra.mxu0 %v351
    %430 = vmatprep.subr.mxu0 %v354
    %431 = vmatpush1.msra.mxu0 %v353
    %432 = vmatprep.subr.mxu0 %v356
    %433 = vmatpush1.msra.mxu0 %v355
    %434 = vmatprep.subr.mxu0 %v358
    %435 = vmatpush1.msra.mxu0 %v357
    %436 = vmatprep.subr.mxu0 %v360
    %437 = vmatpush1.msra.mxu0 %v359
    %438 = vmatprep.subr.mxu0 %v362
    %439 = vmatpush1.msra.mxu0 %v361
    %440 = vmatprep.subr.mxu0 %v364
    %441 = vmatpush1.msra.mxu0 %v363
    %442 = vmatprep.subr.mxu0 %v366
    %443 = vmatpush1.msra.mxu0 %v365
    %444 = vmatprep.subr.mxu0 %v368
    %445 = vmatpush1.msra.mxu0 %v367
    %446 = vmatprep.subr.mxu0 %v370
    %447 = vmatpush1.msra.mxu0 %v369
    %448 = vmatprep.subr.mxu0 %v372
    %449 = vmatpush1.msra.mxu0 %v371
    %450 = vmatprep.subr.mxu0 %v374
    %451 = vmatpush1.msra.mxu0 %v373
    %452 = vmatprep.subr.mxu0 %v376
    %453 = vmatpush1.msra.mxu0 %v375
    %454 = vmatprep.subr.mxu0 %v378
    %455 = vmatpush1.msra.mxu0 %v377
    %456 = vmatprep.subr.mxu0 %v380
    %457 = vmatpush1.msra.mxu0 %v379
    %458 = vmatprep.subr.mxu0 %v382
    %459 = vmatpush1.msra.mxu0 %v381
    %460 = vmatprep.subr.mxu0 %v384
    %461 = vmatpush1.msra.mxu0 %v383
    %462 = vmatprep.subr.mxu0 %v386
    %463 = vmatpush1.msra.mxu0 %v385
    %464 = vmatprep.subr.mxu0 %v388
    %465 = vmatpush1.msra.mxu0 %v387
    %466 = vmatprep.subr.mxu0 %v390
    %467 = vmatpush1.msra.mxu0 %v389
    %468 = vmatprep.subr.mxu0 %v392
    %469 = vmatpush1.msra.mxu0 %v391
    %470 = vmatprep.subr.mxu0 %v394
    %471 = vmatpush1.msra.mxu0 %v393
    %472 = vmatprep.subr.mxu0 %v396
    %473 = vmatpush1.msra.mxu0 %v395
    %474 = vmatprep.subr.mxu0 %v398
    %475 = vmatpush1.msra.mxu0 %v397
    %476 = vmatprep.subr.mxu0 %v400
    %477 = vmatpush1.msra.mxu0 %v399
    %478 = vmatprep.subr.mxu0 %v402
    %479 = vmatpush1.msra.mxu0 %v401
    %480 = vmatprep.subr.mxu0 %v404
    %481 = vmatpush1.msra.mxu0 %v403
    %482 = vmatprep.subr.mxu0 %v406
    %483 = vmatpush1.msra.mxu0 %v405
    %484 = vmatprep.subr.mxu0 %v408
    %485 = vmatpush1.msra.mxu0 %v407
    %486 = vmatprep.mubr.f32.mxu0 %v343
    %487 = vmatmul.mubr.f32.gmra.mrb[0].mxu0 %v342
    %v488 = vpop.f32.mrb[0].mxu0
    %v489 = vadd.f32 %v415, %v488
    %v490 = vpop.f32.mrb[0].mxu0
    %v491 = vadd.f32 %v419, %v490
    %492 = vdwg.mxu0
    %v493 = vld [vmem:[#allocation8 + $0xb] ss:$0 sm:$0xff]
    %v494 = vld [vmem:[#allocation8 + $0xc] ss:$0 sm:$0xff]
    %v495 = vsub.f32 %v493, %v491
    %v496 = vmax.f32 %v495, 0.0
    %vm497 = vcmp.ne.f32.partialorder %v495, %v495
    %v498 = vadd.f32 %v495, 0.0
    %v499 = vand.u32 2147483647, %v495
    %v500 = vsub.f32 0.0, %v499
    %v501 = vmul.f32 %v500, 1.442695
    %v502 = vpow.pop %v501
    %v503 = vadd.f32 %v502, 1.0
    %v504 = vlog2.pop %v503
    %v505 = vmul.f32 %v504, 0.6931472
    %v506 = vmul.f32 -0.5, %v502
    %v507 = vadd.f32 %v506, 1.0
    %v508 = vmul.f32 %v507, %v502
    %v509 = vand.u32 2147483647, %v502
    %vm510 = vcmp.lt.f32.partialorder %v509, 0.0004427343
    %v511 = vsel %vm510, %v508, %v505
    %v512 = vadd.f32 %v496, %v511
    %v513 = vsel %vm497, %v498, %v512
    %v514 = vsub.f32 %v493, %v513
    %v515 = vsub.f32 %v514, %v494
    %v516 = vmax.f32 %v515, 0.0
    %vm517 = vcmp.ne.f32.partialorder %v515, %v515
    %v518 = vadd.f32 %v515, 0.0
    %v519 = vand.u32 2147483647, %v515
    %v520 = vsub.f32 0.0, %v519
    %v521 = vmul.f32 %v520, 1.442695
    %v522 = vpow.pop %v521
    %v523 = vadd.f32 %v522, 1.0
    %v524 = vlog2.pop %v523
    %v525 = vmul.f32 %v524, 0.6931472
    %v526 = vmul.f32 -0.5, %v522
    %v527 = vadd.f32 %v526, 1.0
    %v528 = vmul.f32 %v527, %v522
    %v529 = vand.u32 2147483647, %v522
    %vm530 = vcmp.lt.f32.partialorder %v529, 0.0004427343
    %v531 = vsel %vm530, %v528, %v525
    %v532 = vadd.f32 %v516, %v531
    %v533 = vsel %vm517, %v518, %v532
    %v534 = vadd.f32 %v494, %v533
    %535 = vst [vmem:[#allocation10] sm:$0xff] %v489
    %536 = vst [vmem:[#allocation10 + $0x8] sm:$0xff] %v534
    // Predicated region
    $region34: #{tpu_custom_call.1} parent=1 // pred_check
      _
    $region35: #{tpu_custom_call.1} parent=1 // pred_check_branch
      %538 = sbr.rel (0) target = $region37
    $region36: #{tpu_custom_call.1} parent=1 // pred_region
      %s540 = ssub.s32 256, 256
      %541 = vsyncadd [#allocation4], %s540
      %s543 = sshll.u32 [#allocation10], 4
      %s544 = int_to_ptr.vmem [resolvable:$true] %s543
      %546 = dma.vmem_to_hbm [thread:$0]  %s544, 256, %s4, [#allocation4]
    $region37: #{tpu_custom_call.1} parent=1 // pred_fallthru
      _
    // Predicated region
    $region38: #{tpu_custom_call.1} parent=1 // pred_check
      _
    $region39: #{tpu_custom_call.1} parent=1 // pred_check_branch
      %548 = sbr.rel (0) target = $region41
    $region40: #{tpu_custom_call.1} parent=1 // pred_region
      %549 = dma.done [#allocation4], 256
    $region41: #{tpu_custom_call.1} parent=1 // pred_fallthru
      _
    %550 = vsyncpa [#allocation3], 1
    %551 = vsyncpa [#allocation6], 1
    %552 = vsyncpa [#allocation9], 1
    %553 = vsyncpa [#allocation4], 1

</llo_original>
